<compile_context>
chip_gen: v6e
topology: v6e:2x2x1
jax: 0.10.0
libtpu: 0.0.40
codegen_flags: <defaults>
</compile_context>

<pallas_src>
import functools
import math

import jax
import jax.numpy as jnp
from jax.experimental import pallas as pl
from jax.experimental.pallas import tpu as pltpu

MAX_SIGMOID = 1.0 - 1e-06
MIN_SIGMOID = 1e-06
# -log(clamp(sigmoid(x), MIN, MAX)) == clip(-log(sigmoid(x)), ERR_MIN, ERR_MAX)
ERR_MIN = -math.log(MAX_SIGMOID)   # ~1.0000005e-6
ERR_MAX = -math.log(MIN_SIGMOID)   # ~13.815511


def _w2v_loss_kernel(iemb_ref, oembT_ref, ng_ref, msk_ref, tgt_ref, part_ref,
                     *, b_tile, n_ctx, n_tgt, vocab):
    """One grid step = one tile of b_tile examples, fully vectorized."""
    f32 = jnp.float32
    iota_v = jax.lax.broadcasted_iota(jnp.int32, (b_tile, vocab), 1)

    # ---- NgramsEmbed, pooling == 'avg' -------------------------------------
    # W[b, v] = sum_n msk[b, n] * [ngrams[b, n] == v]  (weighted one-hot counts)
    # ctx_sum = W @ iEmb reproduces the masked sum of gathered iEmb rows.
    ng = ng_ref[...]                                     # (b_tile, n_ctx) int32
    msk = msk_ref[...]                                   # (b_tile, n_ctx) f32
    w = jnp.zeros((b_tile, vocab), f32)
    for n in range(n_ctx):                               # static unroll (n_ctx small)
        oh_n = (ng[:, n:n + 1] == iota_v).astype(f32)    # (b_tile, vocab)
        w = w + oh_n * msk[:, n:n + 1]
    cnt = jnp.sum(msk, axis=1, keepdims=True)            # (b_tile, 1)
    # Precondition (same as the torch module): every example has >= 1 unmasked
    # ngram; otherwise this is 0/0 -> NaN, exactly like torch.
    inv = 1.0 / cnt                                      # one vector divide per tile
    ctx = jnp.dot(w, iemb_ref[...],
                  preferred_element_type=f32) * inv      # (b_tile, D), MXU

    # ---- scores vs the whole (small) vocab: one MXU matmul ------------------
    s_all = jnp.dot(ctx, oembT_ref[...],
                    preferred_element_type=f32)          # (b_tile, vocab)

    # ---- pick the (1 positive + K negative) target scores per example -------
    # Column 0 of tgt is wrd (positive); the torch .neg() on oEmb(neg) is folded
    # as a sign flip on the positive logit instead:
    #   err_pos = softplus(-pos), err_neg_k = softplus(+s_k)
    tgt = tgt_ref[...]                                   # (b_tile, n_tgt) int32
    iota_t = jax.lax.broadcasted_iota(jnp.int32, (1, n_tgt), 1)
    z = jnp.zeros((b_tile, n_tgt), f32)
    for t in range(n_tgt):                               # static unroll (n_tgt small)
        oh_t = (tgt[:, t:t + 1] == iota_v).astype(f32)   # (b_tile, vocab)
        s = jnp.sum(s_all * oh_t, axis=1, keepdims=True)  # (b_tile, 1)
        s = -s if t == 0 else s
        z = z + jnp.where(iota_t == t, s, 0.0)            # scatter into lane t

    # ---- batched stable -log(clamp(sigmoid(.))) == clipped softplus ---------
    errs = jnp.clip(jnp.maximum(z, 0.0) + jnp.log(1.0 + jnp.exp(-jnp.abs(z))),
                    ERR_MIN, ERR_MAX)                    # (b_tile, n_tgt)
    per_ex = jnp.sum(errs, axis=1, keepdims=True)        # (b_tile, 1)

    # Lane-dense unmasked store; wrapper sums partials[:, :, 0] / B.
    part_ref[...] = jnp.broadcast_to(per_ex[None, :, :], part_ref.shape)


def word2vec_loss(iEmb, oEmb, wrd, ngrams, neg, msk, *, b_tile=16):
    """Forward pass of the Word2Vec module (pooling='avg') -> scalar loss."""
    B, N = ngrams.shape
    K = neg.shape[1]
    VS, DS = iEmb.shape
    assert B % b_tile == 0, "batch size must be a multiple of b_tile"
    assert b_tile % 8 == 0, "b_tile must be a multiple of 8 (sublane alignment)"
    G = B // b_tile
    T = 1 + K

    # Wrapper-side layout plumbing (not compute hoisting):
    #  * oEmb transposed so the score matmul RHS is lane-dense (D, VS),
    #  * wrd|neg concatenated into one (B, 1+K) int32 target tile.
    oEmbT = jnp.transpose(oEmb)
    ng_i = ngrams.astype(jnp.int32)
    tgt_i = jnp.concatenate([wrd.astype(jnp.int32)[:, None],
                             neg.astype(jnp.int32)], axis=1)
    msk_f = msk.astype(jnp.float32)

    kernel = functools.partial(_w2v_loss_kernel,
                               b_tile=b_tile, n_ctx=N, n_tgt=T, vocab=VS)

    grid_spec = pltpu.PrefetchScalarGridSpec(
        num_scalar_prefetch=0,
        grid=(G,),
        in_specs=[
            # Whole embedding tables resident in VMEM (constant block index =>
            # DMA'd once and reused by every grid step).
            pl.BlockSpec((VS, DS), lambda i: (0, 0)),     # iEmb
            pl.BlockSpec((DS, VS), lambda i: (0, 0)),     # oEmb^T
            # Per-tile index / mask blocks (small VMEM tiles, no SMEM scalars).
            pl.BlockSpec((b_tile, N), lambda i: (i, 0)),  # ngrams
            pl.BlockSpec((b_tile, N), lambda i: (i, 0)),  # mask (f32)
            pl.BlockSpec((b_tile, T), lambda i: (i, 0)),  # [wrd | neg] targets
        ],
        out_specs=pl.BlockSpec((1, b_tile, 128), lambda i: (i, 0, 0)),
    )

    # Explicit VMEM budget: double-buffered f32 tables + headroom (v5e's
    # default scoped limit is only 16 MiB; v7x physical VMEM is 64 MiB).
    table_vmem = 2 * 2 * (VS * DS * 4)
    vmem_limit = int(min(max(table_vmem + (8 << 20), 16 << 20), 60 << 20))

    partials = pl.pallas_call(
        kernel,
        grid_spec=grid_spec,
        out_shape=jax.ShapeDtypeStruct((G, b_tile, 128), jnp.float32),
        compiler_params=pltpu.CompilerParams(
            dimension_semantics=("parallel",),   # splits G>=2 across v7x's 2 TCs
            vmem_limit_bytes=vmem_limit),
    )(iEmb, oEmbT, ng_i, msk_f, tgt_i)

    # Mean over the GLOBAL batch, done once in the wrapper.
    return jnp.sum(partials[:, :, 0]) / B


if __name__ == "__main__":
    # Module config (synthetic, deterministic init).
    vs, ds = 64, 128          # vocab size, embedding dim (lane-aligned)
    B, N, K = 32, 8, 4        # batch, context ngrams per example, negatives

    key = jax.random.PRNGKey(0)
    k_i, k_o, k_w, k_n, k_g, k_m = jax.random.split(key, 6)

    # nn.init.uniform_(weight, -0.1, 0.1) for both embedding tables.
    iEmb = jax.random.uniform(k_i, (vs, ds), jnp.float32, -0.1, 0.1)
    oEmb = jax.random.uniform(k_o, (vs, ds), jnp.float32, -0.1, 0.1)

    # batch = (wrd, ngrams, neg, msk)
    wrd = jax.random.randint(k_w, (B,), 0, vs, dtype=jnp.int32)          # batch[0]
    ngrams = jax.random.randint(k_g, (B, N), 0, vs, dtype=jnp.int32)     # batch[1]
    neg = jax.random.randint(k_n, (B, K), 0, vs, dtype=jnp.int32)        # batch[2]
    msk = jax.random.uniform(k_m, (B, N)) < 0.7                          # batch[3]
    msk = msk.at[:, 0].set(True)   # ensure every row has >=1 valid context

    loss = word2vec_loss(iEmb, oEmb, wrd, ngrams, neg, msk, b_tile=16)
    jax.block_until_ready(loss)

    # Pure-JAX, torch-faithful reference for a sanity check.
    def ref_loss(iEmb, oEmb, wrd, ngrams, neg, msk):
        mf = msk.astype(jnp.float32)
        ng = iEmb[ngrams]
        ctx = jnp.sum(ng * mf[:, :, None], axis=1) / jnp.sum(mf, axis=1,
                                                             keepdims=True)
        we = oEmb[wrd]
        ne = -oEmb[neg]
        pos = jnp.sum(ctx * we, axis=-1)
        pe = -jnp.log(jnp.clip(jax.nn.sigmoid(pos), MIN_SIGMOID, MAX_SIGMOID))
        l = jnp.mean(pe)
        ns = jnp.einsum("bd,bkd->bk", ctx, ne)
        nerr = -jnp.log(jnp.clip(jax.nn.sigmoid(ns), MIN_SIGMOID, MAX_SIGMOID))
        return l + jnp.mean(jnp.sum(nerr, axis=1))

    ref = ref_loss(iEmb, oEmb, wrd, ngrams, neg, msk)
    # Tolerance leaves headroom for MXU f32 matmul accumulation-order /
    # multi-pass precision differences vs the gather+sum reference.
    assert jnp.allclose(loss, ref, rtol=5e-3, atol=5e-3), (loss, ref)
    print("KERNEL_OK")
</pallas_src>

<mosaic_0001>
module attributes {stable_mosaic.version = 11 : i64} {
  func.func @_w2v_loss_kernel(%arg0: i32, %arg1: memref<64x128xf32, #tpu.memory_space<vmem>>, %arg2: memref<128x64xf32, #tpu.memory_space<vmem>>, %arg3: memref<16x8xi32, #tpu.memory_space<vmem>>, %arg4: memref<16x8xf32, #tpu.memory_space<vmem>>, %arg5: memref<16x5xi32, #tpu.memory_space<vmem>>, %arg6: memref<1x16x128xf32, #tpu.memory_space<vmem>>) attributes {dimension_semantics = [#tpu.dimension_semantics<parallel>], iteration_bounds = array<i64: 2>, scalar_prefetch = 0 : i64, scratch_operands = 0 : i64, tpu.core_type = #tpu.core_type<tc>, window_params = [{pipeline_mode = #tpu.pipeline_mode<synchronous>, transform_indices = @transform_0, window_bounds = array<i64: 64, 128>}, {pipeline_mode = #tpu.pipeline_mode<synchronous>, transform_indices = @transform_1, window_bounds = array<i64: 128, 64>}, {transform_indices = @transform_2, window_bounds = array<i64: 16, 8>}, {transform_indices = @transform_3, window_bounds = array<i64: 16, 8>}, {transform_indices = @transform_4, window_bounds = array<i64: 16, 5>}, {transform_indices = @transform_5, window_bounds = array<i64: 1, 16, 128>}]} {
    %0 = tpu.iota {dimensions = array<i32: 1>} : vector<16x64xi32>
    %c0 = arith.constant 0 : index
    %c0_0 = arith.constant 0 : index
    %1 = vector.load %arg3[%c0, %c0_0] : memref<16x8xi32, #tpu.memory_space<vmem>>, vector<16x8xi32>
    %c0_1 = arith.constant 0 : index
    %c0_2 = arith.constant 0 : index
    %2 = vector.load %arg4[%c0_1, %c0_2] : memref<16x8xf32, #tpu.memory_space<vmem>>, vector<16x8xf32>
    %cst = arith.constant 0.000000e+00 : f32
    %3 = vector.broadcast %cst : f32 to vector<16x64xf32>
    %4 = vector.extract_strided_slice %1 {offsets = [0, 0], sizes = [16, 1], strides = [1, 1]} : vector<16x8xi32> to vector<16x1xi32>
    %5 = vector.broadcast %4 : vector<16x1xi32> to vector<16x64xi32>
    %6 = arith.cmpi eq, %5, %0 : vector<16x64xi32>
    %7 = arith.extui %6 : vector<16x64xi1> to vector<16x64xi32>
    %8 = arith.sitofp %7 : vector<16x64xi32> to vector<16x64xf32>
    %9 = vector.extract_strided_slice %2 {offsets = [0, 0], sizes = [16, 1], strides = [1, 1]} : vector<16x8xf32> to vector<16x1xf32>
    %10 = vector.broadcast %9 : vector<16x1xf32> to vector<16x64xf32>
    %11 = arith.mulf %8, %10 : vector<16x64xf32>
    %12 = arith.addf %3, %11 : vector<16x64xf32>
    %13 = vector.extract_strided_slice %1 {offsets = [0, 1], sizes = [16, 1], strides = [1, 1]} : vector<16x8xi32> to vector<16x1xi32>
    %14 = vector.broadcast %13 : vector<16x1xi32> to vector<16x64xi32>
    %15 = arith.cmpi eq, %14, %0 : vector<16x64xi32>
    %16 = arith.extui %15 : vector<16x64xi1> to vector<16x64xi32>
    %17 = arith.sitofp %16 : vector<16x64xi32> to vector<16x64xf32>
    %18 = vector.extract_strided_slice %2 {offsets = [0, 1], sizes = [16, 1], strides = [1, 1]} : vector<16x8xf32> to vector<16x1xf32>
    %19 = vector.broadcast %18 : vector<16x1xf32> to vector<16x64xf32>
    %20 = arith.mulf %17, %19 : vector<16x64xf32>
    %21 = arith.addf %12, %20 : vector<16x64xf32>
    %22 = vector.extract_strided_slice %1 {offsets = [0, 2], sizes = [16, 1], strides = [1, 1]} : vector<16x8xi32> to vector<16x1xi32>
    %23 = vector.broadcast %22 : vector<16x1xi32> to vector<16x64xi32>
    %24 = arith.cmpi eq, %23, %0 : vector<16x64xi32>
    %25 = arith.extui %24 : vector<16x64xi1> to vector<16x64xi32>
    %26 = arith.sitofp %25 : vector<16x64xi32> to vector<16x64xf32>
    %27 = vector.extract_strided_slice %2 {offsets = [0, 2], sizes = [16, 1], strides = [1, 1]} : vector<16x8xf32> to vector<16x1xf32>
    %28 = vector.broadcast %27 : vector<16x1xf32> to vector<16x64xf32>
    %29 = arith.mulf %26, %28 : vector<16x64xf32>
    %30 = arith.addf %21, %29 : vector<16x64xf32>
    %31 = vector.extract_strided_slice %1 {offsets = [0, 3], sizes = [16, 1], strides = [1, 1]} : vector<16x8xi32> to vector<16x1xi32>
    %32 = vector.broadcast %31 : vector<16x1xi32> to vector<16x64xi32>
    %33 = arith.cmpi eq, %32, %0 : vector<16x64xi32>
    %34 = arith.extui %33 : vector<16x64xi1> to vector<16x64xi32>
    %35 = arith.sitofp %34 : vector<16x64xi32> to vector<16x64xf32>
    %36 = vector.extract_strided_slice %2 {offsets = [0, 3], sizes = [16, 1], strides = [1, 1]} : vector<16x8xf32> to vector<16x1xf32>
    %37 = vector.broadcast %36 : vector<16x1xf32> to vector<16x64xf32>
    %38 = arith.mulf %35, %37 : vector<16x64xf32>
    %39 = arith.addf %30, %38 : vector<16x64xf32>
    %40 = vector.extract_strided_slice %1 {offsets = [0, 4], sizes = [16, 1], strides = [1, 1]} : vector<16x8xi32> to vector<16x1xi32>
    %41 = vector.broadcast %40 : vector<16x1xi32> to vector<16x64xi32>
    %42 = arith.cmpi eq, %41, %0 : vector<16x64xi32>
    %43 = arith.extui %42 : vector<16x64xi1> to vector<16x64xi32>
    %44 = arith.sitofp %43 : vector<16x64xi32> to vector<16x64xf32>
    %45 = vector.extract_strided_slice %2 {offsets = [0, 4], sizes = [16, 1], strides = [1, 1]} : vector<16x8xf32> to vector<16x1xf32>
    %46 = vector.broadcast %45 : vector<16x1xf32> to vector<16x64xf32>
    %47 = arith.mulf %44, %46 : vector<16x64xf32>
    %48 = arith.addf %39, %47 : vector<16x64xf32>
    %49 = vector.extract_strided_slice %1 {offsets = [0, 5], sizes = [16, 1], strides = [1, 1]} : vector<16x8xi32> to vector<16x1xi32>
    %50 = vector.broadcast %49 : vector<16x1xi32> to vector<16x64xi32>
    %51 = arith.cmpi eq, %50, %0 : vector<16x64xi32>
    %52 = arith.extui %51 : vector<16x64xi1> to vector<16x64xi32>
    %53 = arith.sitofp %52 : vector<16x64xi32> to vector<16x64xf32>
    %54 = vector.extract_strided_slice %2 {offsets = [0, 5], sizes = [16, 1], strides = [1, 1]} : vector<16x8xf32> to vector<16x1xf32>
    %55 = vector.broadcast %54 : vector<16x1xf32> to vector<16x64xf32>
    %56 = arith.mulf %53, %55 : vector<16x64xf32>
    %57 = arith.addf %48, %56 : vector<16x64xf32>
    %58 = vector.extract_strided_slice %1 {offsets = [0, 6], sizes = [16, 1], strides = [1, 1]} : vector<16x8xi32> to vector<16x1xi32>
    %59 = vector.broadcast %58 : vector<16x1xi32> to vector<16x64xi32>
    %60 = arith.cmpi eq, %59, %0 : vector<16x64xi32>
    %61 = arith.extui %60 : vector<16x64xi1> to vector<16x64xi32>
    %62 = arith.sitofp %61 : vector<16x64xi32> to vector<16x64xf32>
    %63 = vector.extract_strided_slice %2 {offsets = [0, 6], sizes = [16, 1], strides = [1, 1]} : vector<16x8xf32> to vector<16x1xf32>
    %64 = vector.broadcast %63 : vector<16x1xf32> to vector<16x64xf32>
    %65 = arith.mulf %62, %64 : vector<16x64xf32>
    %66 = arith.addf %57, %65 : vector<16x64xf32>
    %67 = vector.extract_strided_slice %1 {offsets = [0, 7], sizes = [16, 1], strides = [1, 1]} : vector<16x8xi32> to vector<16x1xi32>
    %68 = vector.broadcast %67 : vector<16x1xi32> to vector<16x64xi32>
    %69 = arith.cmpi eq, %68, %0 : vector<16x64xi32>
    %70 = arith.extui %69 : vector<16x64xi1> to vector<16x64xi32>
    %71 = arith.sitofp %70 : vector<16x64xi32> to vector<16x64xf32>
    %72 = vector.extract_strided_slice %2 {offsets = [0, 7], sizes = [16, 1], strides = [1, 1]} : vector<16x8xf32> to vector<16x1xf32>
    %73 = vector.broadcast %72 : vector<16x1xf32> to vector<16x64xf32>
    %74 = arith.mulf %71, %73 : vector<16x64xf32>
    %75 = arith.addf %66, %74 : vector<16x64xf32>
    %cst_3 = arith.constant dense<0.000000e+00> : vector<16xf32>
    %76 = vector.multi_reduction <add>, %2, %cst_3 [1] : vector<16x8xf32> to vector<16xf32>
    %77 = vector.shape_cast %76 : vector<16xf32> to vector<16x1xf32>
    %cst_4 = arith.constant 1.000000e+00 : f32
    %78 = vector.broadcast %cst_4 : f32 to vector<16x1xf32>
    %79 = arith.divf %78, %77 : vector<16x1xf32>
    %c0_5 = arith.constant 0 : index
    %c0_6 = arith.constant 0 : index
    %80 = vector.load %arg1[%c0_5, %c0_6] : memref<64x128xf32, #tpu.memory_space<vmem>>, vector<64x128xf32>
    %cst_7 = arith.constant dense<0.000000e+00> : vector<16x128xf32>
    %81 = tpu.matmul %75, %80, %cst_7 {dimension_numbers = #tpu.dot_dimension_numbers<[1], [0], [0], [1], [0, 0, 1, 1], [], []>} : vector<16x64xf32>, vector<64x128xf32>, vector<16x128xf32> -> vector<16x128xf32>
    %82 = vector.broadcast %79 : vector<16x1xf32> to vector<16x128xf32>
    %83 = arith.mulf %81, %82 : vector<16x128xf32>
    %c0_8 = arith.constant 0 : index
    %c0_9 = arith.constant 0 : index
    %84 = vector.load %arg2[%c0_8, %c0_9] : memref<128x64xf32, #tpu.memory_space<vmem>>, vector<128x64xf32>
    %cst_10 = arith.constant dense<0.000000e+00> : vector<16x64xf32>
    %85 = tpu.matmul %83, %84, %cst_10 {dimension_numbers = #tpu.dot_dimension_numbers<[1], [0], [0], [1], [0, 0, 1, 1], [], []>} : vector<16x128xf32>, vector<128x64xf32>, vector<16x64xf32> -> vector<16x64xf32>
    %c0_11 = arith.constant 0 : index
    %c0_12 = arith.constant 0 : index
    %86 = vector.load %arg5[%c0_11, %c0_12] : memref<16x5xi32, #tpu.memory_space<vmem>>, vector<16x5xi32>
    %87 = tpu.iota {dimensions = array<i32: 1>} : vector<1x5xi32>
    %cst_13 = arith.constant 0.000000e+00 : f32
    %88 = vector.broadcast %cst_13 : f32 to vector<16x5xf32>
    %89 = vector.extract_strided_slice %86 {offsets = [0, 0], sizes = [16, 1], strides = [1, 1]} : vector<16x5xi32> to vector<16x1xi32>
    %90 = vector.broadcast %89 : vector<16x1xi32> to vector<16x64xi32>
    %91 = arith.cmpi eq, %90, %0 : vector<16x64xi32>
    %92 = arith.extui %91 : vector<16x64xi1> to vector<16x64xi32>
    %93 = arith.sitofp %92 : vector<16x64xi32> to vector<16x64xf32>
    %94 = arith.mulf %85, %93 : vector<16x64xf32>
    %cst_14 = arith.constant dense<0.000000e+00> : vector<16xf32>
    %95 = vector.multi_reduction <add>, %94, %cst_14 [1] : vector<16x64xf32> to vector<16xf32>
    %96 = vector.shape_cast %95 : vector<16xf32> to vector<16x1xf32>
    %cst_15 = arith.constant 0.000000e+00 : f32
    %97 = vector.broadcast %cst_15 : f32 to vector<16x1xf32>
    %98 = arith.subf %97, %96 : vector<16x1xf32>
    %c0_i32 = arith.constant 0 : i32
    %99 = vector.broadcast %c0_i32 : i32 to vector<1x5xi32>
    %100 = arith.cmpi eq, %87, %99 : vector<1x5xi32>
    %cst_16 = arith.constant 0.000000e+00 : f32
    %101 = vector.shape_cast %100 : vector<1x5xi1> to vector<1x5xi1>
    %102 = vector.broadcast %101 : vector<1x5xi1> to vector<16x5xi1>
    %103 = vector.shape_cast %98 : vector<16x1xf32> to vector<16x1xf32>
    %104 = vector.broadcast %103 : vector<16x1xf32> to vector<16x5xf32>
    %105 = vector.broadcast %cst_16 : f32 to vector<16x5xf32>
    %106 = arith.select %102, %104, %105 : vector<16x5xi1>, vector<16x5xf32>
    %107 = arith.addf %88, %106 : vector<16x5xf32>
    %108 = vector.extract_strided_slice %86 {offsets = [0, 1], sizes = [16, 1], strides = [1, 1]} : vector<16x5xi32> to vector<16x1xi32>
    %109 = vector.broadcast %108 : vector<16x1xi32> to vector<16x64xi32>
    %110 = arith.cmpi eq, %109, %0 : vector<16x64xi32>
    %111 = arith.extui %110 : vector<16x64xi1> to vector<16x64xi32>
    %112 = arith.sitofp %111 : vector<16x64xi32> to vector<16x64xf32>
    %113 = arith.mulf %85, %112 : vector<16x64xf32>
    %cst_17 = arith.constant dense<0.000000e+00> : vector<16xf32>
    %114 = vector.multi_reduction <add>, %113, %cst_17 [1] : vector<16x64xf32> to vector<16xf32>
    %115 = vector.shape_cast %114 : vector<16xf32> to vector<16x1xf32>
    %c1_i32 = arith.constant 1 : i32
    %116 = vector.broadcast %c1_i32 : i32 to vector<1x5xi32>
    %117 = arith.cmpi eq, %87, %116 : vector<1x5xi32>
    %cst_18 = arith.constant 0.000000e+00 : f32
    %118 = vector.shape_cast %117 : vector<1x5xi1> to vector<1x5xi1>
    %119 = vector.broadcast %118 : vector<1x5xi1> to vector<16x5xi1>
    %120 = vector.shape_cast %115 : vector<16x1xf32> to vector<16x1xf32>
    %121 = vector.broadcast %120 : vector<16x1xf32> to vector<16x5xf32>
    %122 = vector.broadcast %cst_18 : f32 to vector<16x5xf32>
    %123 = arith.select %119, %121, %122 : vector<16x5xi1>, vector<16x5xf32>
    %124 = arith.addf %107, %123 : vector<16x5xf32>
    %125 = vector.extract_strided_slice %86 {offsets = [0, 2], sizes = [16, 1], strides = [1, 1]} : vector<16x5xi32> to vector<16x1xi32>
    %126 = vector.broadcast %125 : vector<16x1xi32> to vector<16x64xi32>
    %127 = arith.cmpi eq, %126, %0 : vector<16x64xi32>
    %128 = arith.extui %127 : vector<16x64xi1> to vector<16x64xi32>
    %129 = arith.sitofp %128 : vector<16x64xi32> to vector<16x64xf32>
    %130 = arith.mulf %85, %129 : vector<16x64xf32>
    %cst_19 = arith.constant dense<0.000000e+00> : vector<16xf32>
    %131 = vector.multi_reduction <add>, %130, %cst_19 [1] : vector<16x64xf32> to vector<16xf32>
    %132 = vector.shape_cast %131 : vector<16xf32> to vector<16x1xf32>
    %c2_i32 = arith.constant 2 : i32
    %133 = vector.broadcast %c2_i32 : i32 to vector<1x5xi32>
    %134 = arith.cmpi eq, %87, %133 : vector<1x5xi32>
    %cst_20 = arith.constant 0.000000e+00 : f32
    %135 = vector.shape_cast %134 : vector<1x5xi1> to vector<1x5xi1>
    %136 = vector.broadcast %135 : vector<1x5xi1> to vector<16x5xi1>
    %137 = vector.shape_cast %132 : vector<16x1xf32> to vector<16x1xf32>
    %138 = vector.broadcast %137 : vector<16x1xf32> to vector<16x5xf32>
    %139 = vector.broadcast %cst_20 : f32 to vector<16x5xf32>
    %140 = arith.select %136, %138, %139 : vector<16x5xi1>, vector<16x5xf32>
    %141 = arith.addf %124, %140 : vector<16x5xf32>
    %142 = vector.extract_strided_slice %86 {offsets = [0, 3], sizes = [16, 1], strides = [1, 1]} : vector<16x5xi32> to vector<16x1xi32>
    %143 = vector.broadcast %142 : vector<16x1xi32> to vector<16x64xi32>
    %144 = arith.cmpi eq, %143, %0 : vector<16x64xi32>
    %145 = arith.extui %144 : vector<16x64xi1> to vector<16x64xi32>
    %146 = arith.sitofp %145 : vector<16x64xi32> to vector<16x64xf32>
    %147 = arith.mulf %85, %146 : vector<16x64xf32>
    %cst_21 = arith.constant dense<0.000000e+00> : vector<16xf32>
    %148 = vector.multi_reduction <add>, %147, %cst_21 [1] : vector<16x64xf32> to vector<16xf32>
    %149 = vector.shape_cast %148 : vector<16xf32> to vector<16x1xf32>
    %c3_i32 = arith.constant 3 : i32
    %150 = vector.broadcast %c3_i32 : i32 to vector<1x5xi32>
    %151 = arith.cmpi eq, %87, %150 : vector<1x5xi32>
    %cst_22 = arith.constant 0.000000e+00 : f32
    %152 = vector.shape_cast %151 : vector<1x5xi1> to vector<1x5xi1>
    %153 = vector.broadcast %152 : vector<1x5xi1> to vector<16x5xi1>
    %154 = vector.shape_cast %149 : vector<16x1xf32> to vector<16x1xf32>
    %155 = vector.broadcast %154 : vector<16x1xf32> to vector<16x5xf32>
    %156 = vector.broadcast %cst_22 : f32 to vector<16x5xf32>
    %157 = arith.select %153, %155, %156 : vector<16x5xi1>, vector<16x5xf32>
    %158 = arith.addf %141, %157 : vector<16x5xf32>
    %159 = vector.extract_strided_slice %86 {offsets = [0, 4], sizes = [16, 1], strides = [1, 1]} : vector<16x5xi32> to vector<16x1xi32>
    %160 = vector.broadcast %159 : vector<16x1xi32> to vector<16x64xi32>
    %161 = arith.cmpi eq, %160, %0 : vector<16x64xi32>
    %162 = arith.extui %161 : vector<16x64xi1> to vector<16x64xi32>
    %163 = arith.sitofp %162 : vector<16x64xi32> to vector<16x64xf32>
    %164 = arith.mulf %85, %163 : vector<16x64xf32>
    %cst_23 = arith.constant dense<0.000000e+00> : vector<16xf32>
    %165 = vector.multi_reduction <add>, %164, %cst_23 [1] : vector<16x64xf32> to vector<16xf32>
    %166 = vector.shape_cast %165 : vector<16xf32> to vector<16x1xf32>
    %c4_i32 = arith.constant 4 : i32
    %167 = vector.broadcast %c4_i32 : i32 to vector<1x5xi32>
    %168 = arith.cmpi eq, %87, %167 : vector<1x5xi32>
    %cst_24 = arith.constant 0.000000e+00 : f32
    %169 = vector.shape_cast %168 : vector<1x5xi1> to vector<1x5xi1>
    %170 = vector.broadcast %169 : vector<1x5xi1> to vector<16x5xi1>
    %171 = vector.shape_cast %166 : vector<16x1xf32> to vector<16x1xf32>
    %172 = vector.broadcast %171 : vector<16x1xf32> to vector<16x5xf32>
    %173 = vector.broadcast %cst_24 : f32 to vector<16x5xf32>
    %174 = arith.select %170, %172, %173 : vector<16x5xi1>, vector<16x5xf32>
    %175 = arith.addf %158, %174 : vector<16x5xf32>
    %cst_25 = arith.constant 0.000000e+00 : f32
    %176 = vector.broadcast %cst_25 : f32 to vector<16x5xf32>
    %177 = arith.maximumf %175, %176 : vector<16x5xf32>
    %178 = math.absf %175 : vector<16x5xf32>
    %cst_26 = arith.constant 0.000000e+00 : f32
    %179 = vector.broadcast %cst_26 : f32 to vector<16x5xf32>
    %180 = arith.subf %179, %178 : vector<16x5xf32>
    %181 = math.exp %180 : vector<16x5xf32>
    %cst_27 = arith.constant 1.000000e+00 : f32
    %182 = vector.broadcast %cst_27 : f32 to vector<16x5xf32>
    %183 = arith.addf %182, %181 : vector<16x5xf32>
    %184 = math.log %183 : vector<16x5xf32>
    %185 = arith.addf %177, %184 : vector<16x5xf32>
    %cst_28 = arith.constant 1.00000045E-6 : f32
    %cst_29 = arith.constant 13.8155107 : f32
    %186 = vector.broadcast %cst_28 : f32 to vector<16x5xf32>
    %187 = arith.maximumf %186, %185 : vector<16x5xf32>
    %188 = vector.broadcast %cst_29 : f32 to vector<16x5xf32>
    %189 = arith.minimumf %188, %187 : vector<16x5xf32>
    %cst_30 = arith.constant dense<0.000000e+00> : vector<16xf32>
    %190 = vector.multi_reduction <add>, %189, %cst_30 [1] : vector<16x5xf32> to vector<16xf32>
    %191 = vector.shape_cast %190 : vector<16xf32> to vector<16x1xf32>
    %192 = vector.shape_cast %191 : vector<16x1xf32> to vector<1x16x1xf32>
    %193 = vector.shape_cast %192 : vector<1x16x1xf32> to vector<1x16x1xf32>
    %194 = vector.broadcast %193 : vector<1x16x1xf32> to vector<1x16x128xf32>
    %c0_31 = arith.constant 0 : index
    %c0_32 = arith.constant 0 : index
    %c0_33 = arith.constant 0 : index
    %195 = vector.load %arg6[%c0_31, %c0_32, %c0_33] : memref<1x16x128xf32, #tpu.memory_space<vmem>>, vector<1x16x128xf32>
    tpu.vector_store %arg6[%c0_31, %c0_32, %c0_33], %194 {strides = array<i32>} : memref<1x16x128xf32, #tpu.memory_space<vmem>>, vector<1x16x128xf32>,
    return
  }
  func.func @transform_0(%arg0: i32) -> (i32, i32) {
    %c0_i32 = arith.constant 0 : i32
    %c0_i32_0 = arith.constant 0 : i32
    %c0_i32_1 = arith.constant 0 : i32
    return %c0_i32, %c0_i32_0 : i32, i32
  }
  func.func @transform_1(%arg0: i32) -> (i32, i32) {
    %c0_i32 = arith.constant 0 : i32
    %c0_i32_0 = arith.constant 0 : i32
    %c0_i32_1 = arith.constant 0 : i32
    return %c0_i32, %c0_i32_0 : i32, i32
  }
  func.func @transform_2(%arg0: i32) -> (i32, i32) {
    %c0_i32 = arith.constant 0 : i32
    %c0_i32_0 = arith.constant 0 : i32
    return %arg0, %c0_i32 : i32, i32
  }
  func.func @transform_3(%arg0: i32) -> (i32, i32) {
    %c0_i32 = arith.constant 0 : i32
    %c0_i32_0 = arith.constant 0 : i32
    return %arg0, %c0_i32 : i32, i32
  }
  func.func @transform_4(%arg0: i32) -> (i32, i32) {
    %c0_i32 = arith.constant 0 : i32
    %c0_i32_0 = arith.constant 0 : i32
    return %arg0, %c0_i32 : i32, i32
  }
  func.func @transform_5(%arg0: i32) -> (i32, i32, i32) {
    %c0_i32 = arith.constant 0 : i32
    %c0_i32_0 = arith.constant 0 : i32
    %c0_i32_1 = arith.constant 0 : i32
    return %arg0, %c0_i32, %c0_i32_0 : i32, i32, i32
  }
}

</mosaic_0001>

<llo_original>
// kernel: tpu_custom_call.1
$region0: #{tpu_custom_call.1}
  #allocation0 [shape = 'u32[]', space=smem, size = 0x4, offset = 0x4, fixed_abs, tag = 'smem constant byte address 0x4 - core index']
  #allocation1 [shape = 'u32[144,128]{1,0:T(1,128)}', space=vmem, size = 0x12000, scoped, tag = 'internal scratch']
  %s0 = inlined_call_operand.vmem [shape: f32[64,128], index: 0, kind: input, shape index: {}]
  %s1 = inlined_call_operand.vmem [shape: f32[128,64], index: 1, kind: input, shape index: {}]
  %s2 = inlined_call_operand.vmem [shape: s32[32,8], index: 2, kind: input, shape index: {}]
  %s3 = inlined_call_operand.vmem [shape: f32[32,8], index: 3, kind: input, shape index: {}]
  %s4 = inlined_call_operand.vmem [shape: s32[32,5], index: 4, kind: input, shape index: {}]
  %s5 = inlined_call_operand.hbm [shape: f32[2,16,128], index: 5, kind: output, shape index: {}]
  %s6 = sld [smem:[#allocation0]]
  $region53: #{tpu_custom_call.1} parent=0
    _
  %s8 = ssub.s32 1, %s6
  %s9 = scalar_select 0, %s8, %s6
  $region1: #{tpu_custom_call.1} parent=0
    #allocation2 [shape = 'u8[16384]{0}', space=vmem, size = 0x4000, scoped, tag = 'output window, operand 0']
    #allocation3 [shape = 's32[2]{0}', space=sflag, size = 0x8, scoped, tag = 'scoped memory for tpu_custom_call.1']
    %10 = vsyncpa [#allocation3], 0
    %s11 = scalar_lea.sflag [#allocation3], 1
    %12 = vsyncpa %s11, 0
    loop: start=0, step=1, limit=4
    $region2: #{tpu_custom_call.1} parent=1 // loop_pre_header
      _
    $region3: #{tpu_custom_call.1} parent=1 // loop_header
      %s14 = sphi 0, %s18
      %p15 = scmp.ge.s32.totalorder %s14, 4
      %s22 = sphi 0, %s22
      %s24 = sphi 0, %s22
      %s25 = sphi 0, %s24
      %s39 = sphi 0, %s25
      %s43 = sphi 0, %s43
      %s45 = sphi 0, %s43
      %s46 = sphi 0, %s45
      %s60 = sphi 0, %s46
      %s66 = sphi 0, %s68
      %s69 = sphi 0, %s66
      %s70 = sphi 0, %s69
      %s86 = sphi 0, %s70
      %s92 = sphi 0, %s94
      %s95 = sphi 0, %s92
      %s96 = sphi 0, %s95
      %s112 = sphi 0, %s96
      %s118 = sphi 0, %s120
      %s121 = sphi 0, %s118
      %s122 = sphi 0, %s121
      %s138 = sphi 0, %s122
      %s144 = sphi 0, %s146
      %s147 = sphi 0, %s144
      %s148 = sphi 0, %s147
      %s164 = sphi 0, %s148
    $region4: #{tpu_custom_call.1} parent=1 // loop_header_branch
      %17 = sbr.rel (%p15) target = $region8
    $region5: #{tpu_custom_call.1} parent=1 // loop_body
      %s19 = ssub.s32 %s14, 1
      %s20 = ssub.s32 %s14, 2
      %s21 = sadd.s32 %s14, 1
      %s23 = sadd.s32 %s22, 1
      %p26 = scmp.eq.s32.totalorder %s14, 1
      %p27 = scmp.ne.s32.totalorder %s22, %s24
      %p28 = scmp.eq.s32.totalorder %s14, 0
      %p29 = por %p27, %p28
      %p30 = scmp.ne.s32.totalorder %s22, %s24
      %p31 = scmp.eq.s32.totalorder %s19, 1
      %p32 = por %p30, %p31
      %p33 = scmp.ne.s32.totalorder %s24, %s25
      %p34 = scmp.eq.s32.totalorder %s19, 0
      %p35 = por %p33, %p34
      %p36 = scmp.ne.s32.totalorder %s24, %s25
      %p37 = scmp.eq.s32.totalorder %s20, 1
      %p38 = por %p36, %p37
      %p40 = scmp.ne.s32.totalorder %s25, %s39
      %p41 = scmp.eq.s32.totalorder %s20, 0
      %p42 = por %p40, %p41
      %s44 = sadd.s32 %s43, 1
      %p47 = scmp.eq.s32.totalorder %s14, 1
      %p48 = scmp.ne.s32.totalorder %s43, %s45
      %p49 = scmp.eq.s32.totalorder %s14, 0
      %p50 = por %p48, %p49
      %p51 = scmp.ne.s32.totalorder %s43, %s45
      %p52 = scmp.eq.s32.totalorder %s19, 1
      %p53 = por %p51, %p52
      %p54 = scmp.ne.s32.totalorder %s45, %s46
      %p55 = scmp.eq.s32.totalorder %s19, 0
      %p56 = por %p54, %p55
      %p57 = scmp.ne.s32.totalorder %s45, %s46
      %p58 = scmp.eq.s32.totalorder %s20, 1
      %p59 = por %p57, %p58
      %p61 = scmp.ne.s32.totalorder %s46, %s60
      %p62 = scmp.eq.s32.totalorder %s20, 0
      %p63 = por %p61, %p62
      %s64 = ssub.s32 %s14, %s21
      %p65 = scmp.eq.s32.totalorder %s64, 0
      %s67 = sadd.s32 %s66, 1
      %s68 = scalar_select %p65, %s66, %s67
      %p71 = pneg %p65
      %p72 = scmp.eq.s32.totalorder %s14, 1
      %p73 = por %p71, %p72
      %p74 = scmp.ne.s32.totalorder %s66, %s69
      %p75 = scmp.eq.s32.totalorder %s14, 0
      %p76 = por %p74, %p75
      %p77 = scmp.ne.s32.totalorder %s66, %s69
      %p78 = scmp.eq.s32.totalorder %s19, 1
      %p79 = por %p77, %p78
      %p80 = scmp.ne.s32.totalorder %s69, %s70
      %p81 = scmp.eq.s32.totalorder %s19, 0
      %p82 = por %p80, %p81
      %p83 = scmp.ne.s32.totalorder %s69, %s70
      %p84 = scmp.eq.s32.totalorder %s20, 1
      %p85 = por %p83, %p84
      %p87 = scmp.ne.s32.totalorder %s70, %s86
      %p88 = scmp.eq.s32.totalorder %s20, 0
      %p89 = por %p87, %p88
      %s90 = ssub.s32 %s14, %s21
      %p91 = scmp.eq.s32.totalorder %s90, 0
      %s93 = sadd.s32 %s92, 1
      %s94 = scalar_select %p91, %s92, %s93
      %p97 = pneg %p91
      %p98 = scmp.eq.s32.totalorder %s14, 1
      %p99 = por %p97, %p98
      %p100 = scmp.ne.s32.totalorder %s92, %s95
      %p101 = scmp.eq.s32.totalorder %s14, 0
      %p102 = por %p100, %p101
      %p103 = scmp.ne.s32.totalorder %s92, %s95
      %p104 = scmp.eq.s32.totalorder %s19, 1
      %p105 = por %p103, %p104
      %p106 = scmp.ne.s32.totalorder %s95, %s96
      %p107 = scmp.eq.s32.totalorder %s19, 0
      %p108 = por %p106, %p107
      %p109 = scmp.ne.s32.totalorder %s95, %s96
      %p110 = scmp.eq.s32.totalorder %s20, 1
      %p111 = por %p109, %p110
      %p113 = scmp.ne.s32.totalorder %s96, %s112
      %p114 = scmp.eq.s32.totalorder %s20, 0
      %p115 = por %p113, %p114
      %s116 = ssub.s32 %s14, %s21
      %p117 = scmp.eq.s32.totalorder %s116, 0
      %s119 = sadd.s32 %s118, 1
      %s120 = scalar_select %p117, %s118, %s119
      %p123 = pneg %p117
      %p124 = scmp.eq.s32.totalorder %s14, 1
      %p125 = por %p123, %p124
      %p126 = scmp.ne.s32.totalorder %s118, %s121
      %p127 = scmp.eq.s32.totalorder %s14, 0
      %p128 = por %p126, %p127
      %p129 = scmp.ne.s32.totalorder %s118, %s121
      %p130 = scmp.eq.s32.totalorder %s19, 1
      %p131 = por %p129, %p130
      %p132 = scmp.ne.s32.totalorder %s121, %s122
      %p133 = scmp.eq.s32.totalorder %s19, 0
      %p134 = por %p132, %p133
      %p135 = scmp.ne.s32.totalorder %s121, %s122
      %p136 = scmp.eq.s32.totalorder %s20, 1
      %p137 = por %p135, %p136
      %p139 = scmp.ne.s32.totalorder %s122, %s138
      %p140 = scmp.eq.s32.totalorder %s20, 0
      %p141 = por %p139, %p140
      %s142 = ssub.s32 %s14, %s21
      %p143 = scmp.eq.s32.totalorder %s142, 0
      %s145 = sadd.s32 %s144, 1
      %s146 = scalar_select %p143, %s144, %s145
      %p149 = pneg %p143
      %p150 = scmp.eq.s32.totalorder %s14, 1
      %p151 = por %p149, %p150
      %p152 = scmp.ne.s32.totalorder %s144, %s147
      %p153 = scmp.eq.s32.totalorder %s14, 0
      %p154 = por %p152, %p153
      %p155 = scmp.ne.s32.totalorder %s144, %s147
      %p156 = scmp.eq.s32.totalorder %s19, 1
      %p157 = por %p155, %p156
      %p158 = scmp.ne.s32.totalorder %s147, %s148
      %p159 = scmp.eq.s32.totalorder %s19, 0
      %p160 = por %p158, %p159
      %p161 = scmp.ne.s32.totalorder %s147, %s148
      %p162 = scmp.eq.s32.totalorder %s20, 1
      %p163 = por %p161, %p162
      %p165 = scmp.ne.s32.totalorder %s148, %s164
      %p166 = scmp.eq.s32.totalorder %s20, 0
      %p167 = por %p165, %p166
      %p168 = scmp.le.s32.totalorder 1, %s14
      %p169 = scmp.lt.s32.totalorder %s14, 3
      %p170 = pnand %p168, %p169
      %p171 = pneg %p170
      // Predicated region
      $region9: #{tpu_custom_call.1} parent=5 // pred_check
        _
      $region10: #{tpu_custom_call.1} parent=5 // pred_check_branch
        %173 = sbr.rel (%p170) target = $region12
      $region11: #{tpu_custom_call.1} parent=5 // pred_region
        %s174 = ssub.s32 %s14, 1
        // Predicated region
        $region13: #{tpu_custom_call.1} parent=11 // pred_check
          %p175 = pneg %p35
        $region14: #{tpu_custom_call.1} parent=11 // pred_check_branch
          %177 = sbr.rel (%p175) target = $region16
        $region15: #{tpu_custom_call.1} parent=11 // pred_region
          _
        $region16: #{tpu_custom_call.1} parent=11 // pred_fallthru
          _
        // Predicated region
        $region17: #{tpu_custom_call.1} parent=11 // pred_check
          %p178 = pneg %p56
        $region18: #{tpu_custom_call.1} parent=11 // pred_check_branch
          %180 = sbr.rel (%p178) target = $region20
        $region19: #{tpu_custom_call.1} parent=11 // pred_region
          _
        $region20: #{tpu_custom_call.1} parent=11 // pred_fallthru
          _
      $region12: #{tpu_custom_call.1} parent=5 // pred_fallthru
        _
      %p181 = scmp.lt.s32.totalorder %s14, 2
      // Predicated region
      $region21: #{tpu_custom_call.1} parent=5 // pred_check
        %p182 = pneg %p181
      $region22: #{tpu_custom_call.1} parent=5 // pred_check_branch
        %184 = sbr.rel (%p182) target = $region24
      $region23: #{tpu_custom_call.1} parent=5 // pred_region
        // Predicated region
        $region25: #{tpu_custom_call.1} parent=23 // pred_check
          %p185 = pneg %p76
        $region26: #{tpu_custom_call.1} parent=23 // pred_check_branch
          %187 = sbr.rel (%p185) target = $region28
        $region27: #{tpu_custom_call.1} parent=23 // pred_region
          %s188 = smul.u32 2, %s14
          %p189 = scmp.lt.s32.totalorder %s188, 3
          %s190 = scalar_select %p189, %s188, 3
          %s191 = smul.addr %s190, 8
          %s192 = scalar_lea.vmem %s2, %s191
          %s193 = smul.u32 2, %s14
        $region28: #{tpu_custom_call.1} parent=23 // pred_fallthru
          _
        // Predicated region
        $region29: #{tpu_custom_call.1} parent=23 // pred_check
          %p194 = pneg %p102
        $region30: #{tpu_custom_call.1} parent=23 // pred_check_branch
          %196 = sbr.rel (%p194) target = $region32
        $region31: #{tpu_custom_call.1} parent=23 // pred_region
          %s197 = smul.u32 2, %s14
          %p198 = scmp.lt.s32.totalorder %s197, 3
          %s199 = scalar_select %p198, %s197, 3
          %s200 = smul.addr %s199, 8
          %s201 = scalar_lea.vmem %s3, %s200
          %s202 = smul.u32 2, %s14
        $region32: #{tpu_custom_call.1} parent=23 // pred_fallthru
          _
        // Predicated region
        $region33: #{tpu_custom_call.1} parent=23 // pred_check
          %p203 = pneg %p128
        $region34: #{tpu_custom_call.1} parent=23 // pred_check_branch
          %205 = sbr.rel (%p203) target = $region36
        $region35: #{tpu_custom_call.1} parent=23 // pred_region
          %s206 = smul.u32 2, %s14
          %p207 = scmp.lt.s32.totalorder %s206, 3
          %s208 = scalar_select %p207, %s206, 3
          %s209 = smul.addr %s208, 8
          %s210 = scalar_lea.vmem %s4, %s209
          %s211 = smul.u32 2, %s14
        $region36: #{tpu_custom_call.1} parent=23 // pred_fallthru
          _
      $region24: #{tpu_custom_call.1} parent=5 // pred_fallthru
        _
      %p212 = scmp.le.s32.totalorder 1, %s14
      %p213 = scmp.lt.s32.totalorder %s14, 3
      %p214 = pnand %p212, %p213
      %p215 = pneg %p214
      // Predicated region
      $region37: #{tpu_custom_call.1} parent=5 // pred_check
        _
      $region38: #{tpu_custom_call.1} parent=5 // pred_check_branch
        %217 = sbr.rel (%p214) target = $region40
      $region39: #{tpu_custom_call.1} parent=5 // pred_region
        %s218 = ssub.s32 %s14, 1
        %p219 = pneg %p35
        %p220 = pneg %p32
        %p221 = pneg %p56
        %p222 = pneg %p53
        %s223 = smul.u32 2, %s19
        %p224 = scmp.lt.s32.totalorder %s223, 3
        %s225 = scalar_select %p224, %s223, 3
        %s226 = smul.addr %s225, 8
        %s227 = scalar_lea.vmem %s2, %s226
        %p228 = pneg %p82
        %p229 = pneg %p79
        %s230 = smul.u32 2, %s19
        %p231 = scmp.lt.s32.totalorder %s230, 3
        %s232 = scalar_select %p231, %s230, 3
        %s233 = smul.addr %s232, 8
        %s234 = scalar_lea.vmem %s3, %s233
        %p235 = pneg %p108
        %p236 = pneg %p105
        %s237 = smul.u32 2, %s19
        %p238 = scmp.lt.s32.totalorder %s237, 3
        %s239 = scalar_select %p238, %s237, 3
        %s240 = smul.addr %s239, 8
        %s241 = scalar_lea.vmem %s4, %s240
        %p242 = pneg %p134
        %p243 = pneg %p131
        %p244 = pneg %p160
        %p245 = pneg %p157
        %s246 = sand.u32 %s147, 1
        %s247 = scalar_lea.sflag [#allocation3], %s246
        %s248 = sand.u32 %s147, 1
        %s249 = smul.addr %s248, 16
        %s250 = scalar_lea.vmem [#allocation2], %s249
        %s251 = smul.u32 2, %s19
        %p252 = scmp.lt.s32.totalorder %s251, 3
        %s253 = scalar_select %p252, %s251, 3
        %s254 = smul.addr %s253, 8
        %s255 = scalar_lea.vmem %s2, %s254
        %s256 = smul.u32 2, %s19
        %s257 = smul.u32 2, %s19
        %p258 = scmp.lt.s32.totalorder %s257, 3
        %s259 = scalar_select %p258, %s257, 3
        %s260 = smul.addr %s259, 8
        %s261 = scalar_lea.vmem %s3, %s260
        %s262 = smul.u32 2, %s19
        %s263 = smul.u32 2, %s19
        %p264 = scmp.lt.s32.totalorder %s263, 3
        %s265 = scalar_select %p264, %s263, 3
        %s266 = smul.addr %s265, 8
        %s267 = scalar_lea.vmem %s4, %s266
        %s268 = smul.u32 2, %s19
        %v269 = vlaneseq
        %v270 = vand.u32 %v269, 127
        %v271 = vld [vmem:[%s255] sm:$0xff]
        %v272 = vld [vmem:[%s255 + $0x8] sm:$0xff]
        %v273 = vld [vmem:[%s261] sm:$0xff]
        %v274 = vld [vmem:[%s261 + $0x8] sm:$0xff]
        %275 = vset.pattern.permute.xlu0 0
        %276 = vperm.xlu0 %275, %v271
        %v277 = vpop.permute.xlu0 %276
        %278 = vset.pattern.permute.xlu0 0
        %279 = vperm.xlu0 %278, %v272
        %v280 = vpop.permute.xlu0 %279
        %vm281 = vcmp.eq.s32.totalorder %v277, %v270
        %vm282 = vcmp.eq.s32.totalorder %v280, %v270
        %v283 = vsel %vm281, 1, 0
        %v284 = vsel %vm282, 1, 0
        %v285 = vcvt.s32.f32 %v283
        %v286 = vcvt.s32.f32 %v284
        %288 = vset.pattern.permute.xlu0 0
        %289 = vperm.xlu0 %288, %v273
        %v290 = vpop.permute.xlu0 %289
        %293 = vset.pattern.permute.xlu0 0
        %294 = vperm.xlu0 %293, %v274
        %v295 = vpop.permute.xlu0 %294
        %v297 = vmul.f32 %v285, %v290
        %v298 = vmul.f32 %v286, %v295
        %v299 = vadd.f32 %v297, 0.0
        %v300 = vadd.f32 %v298, 0.0
        %301 = vset.pattern.permute.xlu0 1
        %302 = vperm.xlu0 %301, %v271
        %v303 = vpop.permute.xlu0 %302
        %304 = vset.pattern.permute.xlu0 1
        %305 = vperm.xlu0 %304, %v272
        %v306 = vpop.permute.xlu0 %305
        %vm307 = vcmp.eq.s32.totalorder %v303, %v270
        %vm308 = vcmp.eq.s32.totalorder %v306, %v270
        %v309 = vsel %vm307, 1, 0
        %v310 = vsel %vm308, 1, 0
        %v311 = vcvt.s32.f32 %v309
        %v312 = vcvt.s32.f32 %v310
        %313 = vset.pattern.permute.xlu0 1
        %314 = vperm.xlu0 %313, %v273
        %v315 = vpop.permute.xlu0 %314
        %317 = vset.pattern.permute.xlu0 1
        %318 = vperm.xlu0 %317, %v274
        %v319 = vpop.permute.xlu0 %318
        %v321 = vmul.f32 %v311, %v315
        %v322 = vmul.f32 %v312, %v319
        %v323 = vadd.f32 %v299, %v321
        %v324 = vadd.f32 %v300, %v322
        %325 = vset.pattern.permute.xlu0 2
        %326 = vperm.xlu0 %325, %v271
        %v327 = vpop.permute.xlu0 %326
        %328 = vset.pattern.permute.xlu0 2
        %329 = vperm.xlu0 %328, %v272
        %v330 = vpop.permute.xlu0 %329
        %vm331 = vcmp.eq.s32.totalorder %v327, %v270
        %vm332 = vcmp.eq.s32.totalorder %v330, %v270
        %v333 = vsel %vm331, 1, 0
        %v334 = vsel %vm332, 1, 0
        %v335 = vcvt.s32.f32 %v333
        %v336 = vcvt.s32.f32 %v334
        %337 = vset.pattern.permute.xlu0 2
        %338 = vperm.xlu0 %337, %v273
        %v339 = vpop.permute.xlu0 %338
        %341 = vset.pattern.permute.xlu0 2
        %342 = vperm.xlu0 %341, %v274
        %v343 = vpop.permute.xlu0 %342
        %v345 = vmul.f32 %v335, %v339
        %v346 = vmul.f32 %v336, %v343
        %v347 = vadd.f32 %v323, %v345
        %v348 = vadd.f32 %v324, %v346
        %349 = vset.pattern.permute.xlu0 3
        %350 = vperm.xlu0 %349, %v271
        %v351 = vpop.permute.xlu0 %350
        %352 = vset.pattern.permute.xlu0 3
        %353 = vperm.xlu0 %352, %v272
        %v354 = vpop.permute.xlu0 %353
        %vm355 = vcmp.eq.s32.totalorder %v351, %v270
        %vm356 = vcmp.eq.s32.totalorder %v354, %v270
        %v357 = vsel %vm355, 1, 0
        %v358 = vsel %vm356, 1, 0
        %v359 = vcvt.s32.f32 %v357
        %v360 = vcvt.s32.f32 %v358
        %361 = vset.pattern.permute.xlu0 3
        %362 = vperm.xlu0 %361, %v273
        %v363 = vpop.permute.xlu0 %362
        %365 = vset.pattern.permute.xlu0 3
        %366 = vperm.xlu0 %365, %v274
        %v367 = vpop.permute.xlu0 %366
        %v369 = vmul.f32 %v359, %v363
        %v370 = vmul.f32 %v360, %v367
        %v371 = vadd.f32 %v347, %v369
        %v372 = vadd.f32 %v348, %v370
        %373 = vset.pattern.permute.xlu0 4
        %374 = vperm.xlu0 %373, %v271
        %v375 = vpop.permute.xlu0 %374
        %376 = vset.pattern.permute.xlu0 4
        %377 = vperm.xlu0 %376, %v272
        %v378 = vpop.permute.xlu0 %377
        %vm379 = vcmp.eq.s32.totalorder %v375, %v270
        %vm380 = vcmp.eq.s32.totalorder %v378, %v270
        %v381 = vsel %vm379, 1, 0
        %v382 = vsel %vm380, 1, 0
        %v383 = vcvt.s32.f32 %v381
        %v384 = vcvt.s32.f32 %v382
        %385 = vset.pattern.permute.xlu0 4
        %386 = vperm.xlu0 %385, %v273
        %v387 = vpop.permute.xlu0 %386
        %389 = vset.pattern.permute.xlu0 4
        %390 = vperm.xlu0 %389, %v274
        %v391 = vpop.permute.xlu0 %390
        %v393 = vmul.f32 %v383, %v387
        %v394 = vmul.f32 %v384, %v391
        %v395 = vadd.f32 %v371, %v393
        %v396 = vadd.f32 %v372, %v394
        %397 = vset.pattern.permute.xlu0 5
        %398 = vperm.xlu0 %397, %v271
        %v399 = vpop.permute.xlu0 %398
        %400 = vset.pattern.permute.xlu0 5
        %401 = vperm.xlu0 %400, %v272
        %v402 = vpop.permute.xlu0 %401
        %vm403 = vcmp.eq.s32.totalorder %v399, %v270
        %vm404 = vcmp.eq.s32.totalorder %v402, %v270
        %v405 = vsel %vm403, 1, 0
        %v406 = vsel %vm404, 1, 0
        %v407 = vcvt.s32.f32 %v405
        %v408 = vcvt.s32.f32 %v406
        %409 = vset.pattern.permute.xlu0 5
        %410 = vperm.xlu0 %409, %v273
        %v411 = vpop.permute.xlu0 %410
        %413 = vset.pattern.permute.xlu0 5
        %414 = vperm.xlu0 %413, %v274
        %v415 = vpop.permute.xlu0 %414
        %v417 = vmul.f32 %v407, %v411
        %v418 = vmul.f32 %v408, %v415
        %v419 = vadd.f32 %v395, %v417
        %v420 = vadd.f32 %v396, %v418
        %421 = vset.pattern.permute.xlu0 6
        %422 = vperm.xlu0 %421, %v271
        %v423 = vpop.permute.xlu0 %422
        %424 = vset.pattern.permute.xlu0 6
        %425 = vperm.xlu0 %424, %v272
        %v426 = vpop.permute.xlu0 %425
        %vm427 = vcmp.eq.s32.totalorder %v423, %v270
        %vm428 = vcmp.eq.s32.totalorder %v426, %v270
        %v429 = vsel %vm427, 1, 0
        %v430 = vsel %vm428, 1, 0
        %v431 = vcvt.s32.f32 %v429
        %v432 = vcvt.s32.f32 %v430
        %433 = vset.pattern.permute.xlu0 6
        %434 = vperm.xlu0 %433, %v273
        %v435 = vpop.permute.xlu0 %434
        %437 = vset.pattern.permute.xlu0 6
        %438 = vperm.xlu0 %437, %v274
        %v439 = vpop.permute.xlu0 %438
        %v441 = vmul.f32 %v431, %v435
        %v442 = vmul.f32 %v432, %v439
        %v443 = vadd.f32 %v419, %v441
        %v444 = vadd.f32 %v420, %v442
        %445 = vset.pattern.permute.xlu0 7
        %446 = vperm.xlu0 %445, %v271
        %v447 = vpop.permute.xlu0 %446
        %448 = vset.pattern.permute.xlu0 7
        %449 = vperm.xlu0 %448, %v272
        %v450 = vpop.permute.xlu0 %449
        %vm451 = vcmp.eq.s32.totalorder %v447, %v270
        %vm452 = vcmp.eq.s32.totalorder %v450, %v270
        %v453 = vsel %vm451, 1, 0
        %v454 = vsel %vm452, 1, 0
        %v455 = vcvt.s32.f32 %v453
        %v456 = vcvt.s32.f32 %v454
        %457 = vset.pattern.permute.xlu0 7
        %458 = vperm.xlu0 %457, %v273
        %v459 = vpop.permute.xlu0 %458
        %461 = vset.pattern.permute.xlu0 7
        %462 = vperm.xlu0 %461, %v274
        %v463 = vpop.permute.xlu0 %462
        %v465 = vmul.f32 %v455, %v459
        %v466 = vmul.f32 %v456, %v463
        %v467 = vadd.f32 %v443, %v465
        %v468 = vadd.f32 %v444, %v466
        %vm469 = vcmask 64512
        %v470 = vsel %vm469, %v273, 0.0
        %471 = vadd.xlane.f32.xlu0 %v470
        %v472 = vpop.xlane.xlu0 %471
        %v473 = vsel %vm469, %v274, 0.0
        %474 = vadd.xlane.f32.xlu0 %v473
        %v475 = vpop.xlane.xlu0 %474
        %v476 = vrcp.pop %v472
        %v477 = vmul.f32 1.0, %v476
        %v478 = vrcp.pop %v475
        %v479 = vmul.f32 1.0, %v478
        %v480 = vld [vmem:[%s0] sm:$0xff]
        %v481 = vld [vmem:[%s0 + $0x8] sm:$0xff]
        %v482 = vld [vmem:[%s0 + $0x10] sm:$0xff]
        %v483 = vld [vmem:[%s0 + $0x18] sm:$0xff]
        %v484 = vld [vmem:[%s0 + $0x20] sm:$0xff]
        %v485 = vld [vmem:[%s0 + $0x28] sm:$0xff]
        %v486 = vld [vmem:[%s0 + $0x30] sm:$0xff]
        %v487 = vld [vmem:[%s0 + $0x38] sm:$0xff]
        %vm488 = vcmask 523264
        %v490 = vsel %vm488, %v467, 0
        %v493 = vsel %vm488, %v468, 0
        %495 = vmatprep.subr.mxu0 0.0
        %496 = vmatpush1.msra.mxu0 0.0
        %497 = vmatprep.subr.mxu0 0.0
        %498 = vmatpush1.msra.mxu0 0.0
        %499 = vmatprep.subr.mxu0 0.0
        %500 = vmatpush1.msra.mxu0 0.0
        %501 = vmatprep.subr.mxu0 0.0
        %502 = vmatpush1.msra.mxu0 0.0
        %503 = vmatprep.subr.mxu0 0.0
        %504 = vmatpush1.msra.mxu0 0.0
        %505 = vmatprep.subr.mxu0 0.0
        %506 = vmatpush1.msra.mxu0 0.0
        %507 = vmatprep.subr.mxu0 0.0
        %508 = vmatpush1.msra.mxu0 0.0
        %509 = vmatprep.subr.mxu0 0.0
        %510 = vmatpush1.msra.mxu0 0.0
        %511 = vmatprep.subr.mxu0 0.0
        %512 = vmatpush1.msra.mxu0 %v487
        %513 = vmatprep.subr.mxu0 0.0
        %514 = vmatpush1.msra.mxu0 %v486
        %515 = vmatprep.subr.mxu0 0.0
        %516 = vmatpush1.msra.mxu0 %v485
        %517 = vmatprep.subr.mxu0 0.0
        %518 = vmatpush1.msra.mxu0 %v484
        %519 = vmatprep.subr.mxu0 0.0
        %520 = vmatpush1.msra.mxu0 %v483
        %521 = vmatprep.subr.mxu0 0.0
        %522 = vmatpush1.msra.mxu0 %v482
        %523 = vmatprep.subr.mxu0 0.0
        %524 = vmatpush1.msra.mxu0 %v481
        %525 = vmatprep.subr.mxu0 0.0
        %526 = vmatpush1.msra.mxu0 %v480
        %527 = vmatprep.subr.mxu0 0.0
        %528 = vmatpush2.msra.mxu0 0.0
        %529 = vmatprep.subr.mxu0 0.0
        %530 = vmatpush2.msra.mxu0 0.0
        %531 = vmatprep.subr.mxu0 0.0
        %532 = vmatpush2.msra.mxu0 0.0
        %533 = vmatprep.subr.mxu0 0.0
        %534 = vmatpush2.msra.mxu0 0.0
        %535 = vmatprep.subr.mxu0 0.0
        %536 = vmatpush2.msra.mxu0 0.0
        %537 = vmatprep.subr.mxu0 0.0
        %538 = vmatpush2.msra.mxu0 0.0
        %539 = vmatprep.subr.mxu0 0.0
        %540 = vmatpush2.msra.mxu0 0.0
        %541 = vmatprep.subr.mxu0 0.0
        %542 = vmatpush2.msra.mxu0 0.0
        %543 = vmatprep.subr.mxu0 0.0
        %544 = vmatpush2.msra.mxu0 0.0
        %545 = vmatprep.subr.mxu0 0.0
        %546 = vmatpush2.msra.mxu0 0.0
        %547 = vmatprep.subr.mxu0 0.0
        %548 = vmatpush2.msra.mxu0 0.0
        %549 = vmatprep.subr.mxu0 0.0
        %550 = vmatpush2.msra.mxu0 0.0
        %551 = vmatprep.subr.mxu0 0.0
        %552 = vmatpush2.msra.mxu0 0.0
        %553 = vmatprep.subr.mxu0 0.0
        %554 = vmatpush2.msra.mxu0 0.0
        %555 = vmatprep.subr.mxu0 0.0
        %556 = vmatpush2.msra.mxu0 0.0
        %557 = vmatprep.subr.mxu0 0.0
        %558 = vmatpush2.msra.mxu0 0.0
        %559 = vmatprep.mubr.f32.mxu0 0.0
        %560 = vmatmul.mubr.f32.gmra.mxu0 %v490
        %v561 = vpop.f32.mrf.mxu0
        %v562 = vadd.f32 0.0, %v561
        %v563 = vpop.f32.mrf.mxu0
        %564 = vmatprep.mubr.f32.mxu0 0.0
        %565 = vmatmul.mubr.f32.gmra.mxu0 %v493
        %v566 = vpop.f32.mrf.mxu0
        %v567 = vadd.f32 0.0, %v566
        %v568 = vpop.f32.mrf.mxu0
        %569 = vdwg.mxu0
        %v570 = vmul.f32 %v562, %v477
        %v571 = vmul.f32 %v567, %v479
        %v572 = vld [vmem:[%s1] sm:$0xff]
        %v573 = vld [vmem:[%s1 + $0x8] sm:$0xff]
        %v574 = vld [vmem:[%s1 + $0x10] sm:$0xff]
        %v575 = vld [vmem:[%s1 + $0x18] sm:$0xff]
        %v576 = vld [vmem:[%s1 + $0x20] sm:$0xff]
        %v577 = vld [vmem:[%s1 + $0x28] sm:$0xff]
        %v578 = vld [vmem:[%s1 + $0x30] sm:$0xff]
        %v579 = vld [vmem:[%s1 + $0x38] sm:$0xff]
        %v580 = vld [vmem:[%s1 + $0x40] sm:$0xff]
        %v581 = vld [vmem:[%s1 + $0x48] sm:$0xff]
        %v582 = vld [vmem:[%s1 + $0x50] sm:$0xff]
        %v583 = vld [vmem:[%s1 + $0x58] sm:$0xff]
        %v584 = vld [vmem:[%s1 + $0x60] sm:$0xff]
        %v585 = vld [vmem:[%s1 + $0x68] sm:$0xff]
        %v586 = vld [vmem:[%s1 + $0x70] sm:$0xff]
        %v587 = vld [vmem:[%s1 + $0x78] sm:$0xff]
        %588 = vmatprep.subr.mxu0 0.0
        %589 = vmatpush1.msra.mxu0 %v587
        %590 = vmatprep.subr.mxu0 0.0
        %591 = vmatpush1.msra.mxu0 %v586
        %592 = vmatprep.subr.mxu0 0.0
        %593 = vmatpush1.msra.mxu0 %v585
        %594 = vmatprep.subr.mxu0 0.0
        %595 = vmatpush1.msra.mxu0 %v584
        %596 = vmatprep.subr.mxu0 0.0
        %597 = vmatpush1.msra.mxu0 %v583
        %598 = vmatprep.subr.mxu0 0.0
        %599 = vmatpush1.msra.mxu0 %v582
        %600 = vmatprep.subr.mxu0 0.0
        %601 = vmatpush1.msra.mxu0 %v581
        %602 = vmatprep.subr.mxu0 0.0
        %603 = vmatpush1.msra.mxu0 %v580
        %604 = vmatprep.subr.mxu0 0.0
        %605 = vmatpush1.msra.mxu0 %v579
        %606 = vmatprep.subr.mxu0 0.0
        %607 = vmatpush1.msra.mxu0 %v578
        %608 = vmatprep.subr.mxu0 0.0
        %609 = vmatpush1.msra.mxu0 %v577
        %610 = vmatprep.subr.mxu0 0.0
        %611 = vmatpush1.msra.mxu0 %v576
        %612 = vmatprep.subr.mxu0 0.0
        %613 = vmatpush1.msra.mxu0 %v575
        %614 = vmatprep.subr.mxu0 0.0
        %615 = vmatpush1.msra.mxu0 %v574
        %616 = vmatprep.subr.mxu0 0.0
        %617 = vmatpush1.msra.mxu0 %v573
        %618 = vmatprep.subr.mxu0 0.0
        %619 = vmatpush1.msra.mxu0 %v572
        %620 = vmatprep.subr.mxu0 0.0
        %621 = vmatpush2.msra.mxu0 0.0
        %622 = vmatprep.subr.mxu0 0.0
        %623 = vmatpush2.msra.mxu0 0.0
        %624 = vmatprep.subr.mxu0 0.0
        %625 = vmatpush2.msra.mxu0 0.0
        %626 = vmatprep.subr.mxu0 0.0
        %627 = vmatpush2.msra.mxu0 0.0
        %628 = vmatprep.subr.mxu0 0.0
        %629 = vmatpush2.msra.mxu0 0.0
        %630 = vmatprep.subr.mxu0 0.0
        %631 = vmatpush2.msra.mxu0 0.0
        %632 = vmatprep.subr.mxu0 0.0
        %633 = vmatpush2.msra.mxu0 0.0
        %634 = vmatprep.subr.mxu0 0.0
        %635 = vmatpush2.msra.mxu0 0.0
        %636 = vmatprep.subr.mxu0 0.0
        %637 = vmatpush2.msra.mxu0 0.0
        %638 = vmatprep.subr.mxu0 0.0
        %639 = vmatpush2.msra.mxu0 0.0
        %640 = vmatprep.subr.mxu0 0.0
        %641 = vmatpush2.msra.mxu0 0.0
        %642 = vmatprep.subr.mxu0 0.0
        %643 = vmatpush2.msra.mxu0 0.0
        %644 = vmatprep.subr.mxu0 0.0
        %645 = vmatpush2.msra.mxu0 0.0
        %646 = vmatprep.subr.mxu0 0.0
        %647 = vmatpush2.msra.mxu0 0.0
        %648 = vmatprep.subr.mxu0 0.0
        %649 = vmatpush2.msra.mxu0 0.0
        %650 = vmatprep.subr.mxu0 0.0
        %651 = vmatpush2.msra.mxu0 0.0
        %652 = vmatprep.mubr.f32.mxu0 0.0
        %653 = vmatmul.mubr.f32.gmra.mxu0 %v570
        %v654 = vpop.f32.mrf.mxu0
        %v655 = vadd.f32 0.0, %v654
        %v656 = vpop.f32.mrf.mxu0
        %657 = vmatprep.mubr.f32.mxu0 0.0
        %658 = vmatmul.mubr.f32.gmra.mxu0 %v571
        %v659 = vpop.f32.mrf.mxu0
        %v660 = vadd.f32 0.0, %v659
        %v661 = vpop.f32.mrf.mxu0
        %662 = vdwg.mxu0
        %v663 = vld [vmem:[%s267] sm:$0xff]
        %v664 = vld [vmem:[%s267 + $0x8] sm:$0xff]
        %665 = vset.pattern.permute.xlu0 0
        %666 = vperm.xlu0 %665, %v663
        %v667 = vpop.permute.xlu0 %666
        %668 = vset.pattern.permute.xlu0 0
        %669 = vperm.xlu0 %668, %v664
        %v670 = vpop.permute.xlu0 %669
        %vm671 = vcmp.eq.s32.totalorder %v667, %v270
        %vm672 = vcmp.eq.s32.totalorder %v670, %v270
        %v673 = vsel %vm671, 1, 0
        %v674 = vsel %vm672, 1, 0
        %v675 = vcvt.s32.f32 %v673
        %v676 = vcvt.s32.f32 %v674
        %v677 = vmul.f32 %v655, %v675
        %v678 = vmul.f32 %v660, %v676
        %v679 = vsel %vm488, %v677, 0.0
        %680 = vadd.xlane.f32.xlu0 %v679
        %v681 = vpop.xlane.xlu0 %680
        %v682 = vsel %vm488, %v678, 0.0
        %683 = vadd.xlane.f32.xlu0 %v682
        %v684 = vpop.xlane.xlu0 %683
        %v685 = vsub.f32 0.0, %v681
        %v686 = vsub.f32 0.0, %v684
        %vm687 = vcmp.eq.s32.totalorder %v270, 0
        %v688 = vsel %vm687, 1, 0
        %vm689 = vcmp.eq.s32.totalorder %v688, 1
        %v690 = vsel %vm689, %v685, 0.0
        %v691 = vsel %vm689, %v686, 0.0
        %v692 = vadd.f32 %v690, 0.0
        %v693 = vadd.f32 %v691, 0.0
        %694 = vset.pattern.permute.xlu0 1
        %695 = vperm.xlu0 %694, %v663
        %v696 = vpop.permute.xlu0 %695
        %697 = vset.pattern.permute.xlu0 1
        %698 = vperm.xlu0 %697, %v664
        %v699 = vpop.permute.xlu0 %698
        %vm700 = vcmp.eq.s32.totalorder %v696, %v270
        %vm701 = vcmp.eq.s32.totalorder %v699, %v270
        %v702 = vsel %vm700, 1, 0
        %v703 = vsel %vm701, 1, 0
        %v704 = vcvt.s32.f32 %v702
        %v705 = vcvt.s32.f32 %v703
        %v706 = vmul.f32 %v655, %v704
        %v707 = vmul.f32 %v660, %v705
        %v708 = vsel %vm488, %v706, 0.0
        %709 = vadd.xlane.f32.xlu0 %v708
        %v710 = vpop.xlane.xlu0 %709
        %v711 = vsel %vm488, %v707, 0.0
        %712 = vadd.xlane.f32.xlu0 %v711
        %v713 = vpop.xlane.xlu0 %712
        %vm714 = vcmp.eq.s32.totalorder %v270, 1
        %v715 = vsel %vm714, 1, 0
        %vm716 = vcmp.eq.s32.totalorder %v715, 1
        %v717 = vsel %vm716, %v710, 0.0
        %v718 = vsel %vm716, %v713, 0.0
        %v719 = vadd.f32 %v692, %v717
        %v720 = vadd.f32 %v693, %v718
        %721 = vset.pattern.permute.xlu0 2
        %722 = vperm.xlu0 %721, %v663
        %v723 = vpop.permute.xlu0 %722
        %724 = vset.pattern.permute.xlu0 2
        %725 = vperm.xlu0 %724, %v664
        %v726 = vpop.permute.xlu0 %725
        %vm727 = vcmp.eq.s32.totalorder %v723, %v270
        %vm728 = vcmp.eq.s32.totalorder %v726, %v270
        %v729 = vsel %vm727, 1, 0
        %v730 = vsel %vm728, 1, 0
        %v731 = vcvt.s32.f32 %v729
        %v732 = vcvt.s32.f32 %v730
        %v733 = vmul.f32 %v655, %v731
        %v734 = vmul.f32 %v660, %v732
        %v735 = vsel %vm488, %v733, 0.0
        %736 = vadd.xlane.f32.xlu0 %v735
        %v737 = vpop.xlane.xlu0 %736
        %v738 = vsel %vm488, %v734, 0.0
        %739 = vadd.xlane.f32.xlu0 %v738
        %v740 = vpop.xlane.xlu0 %739
        %vm741 = vcmp.eq.s32.totalorder %v270, 2
        %v742 = vsel %vm741, 1, 0
        %vm743 = vcmp.eq.s32.totalorder %v742, 1
        %v744 = vsel %vm743, %v737, 0.0
        %v745 = vsel %vm743, %v740, 0.0
        %v746 = vadd.f32 %v719, %v744
        %v747 = vadd.f32 %v720, %v745
        %748 = vset.pattern.permute.xlu0 3
        %749 = vperm.xlu0 %748, %v663
        %v750 = vpop.permute.xlu0 %749
        %751 = vset.pattern.permute.xlu0 3
        %752 = vperm.xlu0 %751, %v664
        %v753 = vpop.permute.xlu0 %752
        %vm754 = vcmp.eq.s32.totalorder %v750, %v270
        %vm755 = vcmp.eq.s32.totalorder %v753, %v270
        %v756 = vsel %vm754, 1, 0
        %v757 = vsel %vm755, 1, 0
        %v758 = vcvt.s32.f32 %v756
        %v759 = vcvt.s32.f32 %v757
        %v760 = vmul.f32 %v655, %v758
        %v761 = vmul.f32 %v660, %v759
        %v762 = vsel %vm488, %v760, 0.0
        %763 = vadd.xlane.f32.xlu0 %v762
        %v764 = vpop.xlane.xlu0 %763
        %v765 = vsel %vm488, %v761, 0.0
        %766 = vadd.xlane.f32.xlu0 %v765
        %v767 = vpop.xlane.xlu0 %766
        %vm768 = vcmp.eq.s32.totalorder %v270, 3
        %v769 = vsel %vm768, 1, 0
        %vm770 = vcmp.eq.s32.totalorder %v769, 1
        %v771 = vsel %vm770, %v764, 0.0
        %v772 = vsel %vm770, %v767, 0.0
        %v773 = vadd.f32 %v746, %v771
        %v774 = vadd.f32 %v747, %v772
        %775 = vset.pattern.permute.xlu0 4
        %776 = vperm.xlu0 %775, %v663
        %v777 = vpop.permute.xlu0 %776
        %778 = vset.pattern.permute.xlu0 4
        %779 = vperm.xlu0 %778, %v664
        %v780 = vpop.permute.xlu0 %779
        %vm781 = vcmp.eq.s32.totalorder %v777, %v270
        %vm782 = vcmp.eq.s32.totalorder %v780, %v270
        %v783 = vsel %vm781, 1, 0
        %v784 = vsel %vm782, 1, 0
        %v785 = vcvt.s32.f32 %v783
        %v786 = vcvt.s32.f32 %v784
        %v787 = vmul.f32 %v655, %v785
        %v788 = vmul.f32 %v660, %v786
        %v789 = vsel %vm488, %v787, 0.0
        %790 = vadd.xlane.f32.xlu0 %v789
        %v791 = vpop.xlane.xlu0 %790
        %v792 = vsel %vm488, %v788, 0.0
        %793 = vadd.xlane.f32.xlu0 %v792
        %v794 = vpop.xlane.xlu0 %793
        %vm795 = vcmp.eq.s32.totalorder %v270, 4
        %v796 = vsel %vm795, 1, 0
        %vm797 = vcmp.eq.s32.totalorder %v796, 1
        %v798 = vsel %vm797, %v791, 0.0
        %v799 = vsel %vm797, %v794, 0.0
        %v800 = vadd.f32 %v773, %v798
        %v801 = vadd.f32 %v774, %v799
        %v802 = vmax.f32 %v800, 0.0
        %v803 = vmax.f32 %v801, 0.0
        %v804 = vand.u32 2147483647, %v800
        %v805 = vand.u32 2147483647, %v801
        %v806 = vsub.f32 0.0, %v804
        %v807 = vsub.f32 0.0, %v805
        %v808 = vmul.f32 %v806, 1.442695
        %v809 = vpow.pop %v808
        %v810 = vmul.f32 %v807, 1.442695
        %v811 = vpow.pop %v810
        %v812 = vadd.f32 %v809, 1.0
        %v813 = vadd.f32 %v811, 1.0
        %v814 = vlog2.pop %v812
        %v815 = vmul.f32 %v814, 0.6931472
        %v816 = vlog2.pop %v813
        %v817 = vmul.f32 %v816, 0.6931472
        %v818 = vadd.f32 %v802, %v815
        %v819 = vadd.f32 %v803, %v817
        %v820 = vmax.f32 %v818, 1.0000005e-06
        %v821 = vmax.f32 %v819, 1.0000005e-06
        %v822 = vmin.f32 %v820, 13.815511
        %v823 = vmin.f32 %v821, 13.815511
        %vm824 = vcmask 39936
        %v825 = vsel %vm824, %v822, 0.0
        %826 = vadd.xlane.f32.xlu0 %v825
        %v827 = vpop.xlane.xlu0 %826
        %v828 = vsel %vm824, %v823, 0.0
        %829 = vadd.xlane.f32.xlu0 %v828
        %v830 = vpop.xlane.xlu0 %829
        %831 = vst [vmem:[%s250] sm:$0xff] %v827
        %832 = vst [vmem:[%s250 + $0x8] sm:$0xff] %v830
        %s833 = sand.u32 %s147, 1
        %s834 = scalar_lea.sflag [#allocation3], %s833
        %s835 = sand.u32 %s147, 1
        %s836 = smul.addr %s835, 16
        %s837 = scalar_lea.vmem [#allocation2], %s836
        // Predicated region
        $region41: #{tpu_custom_call.1} parent=39 // pred_check
          %p838 = pneg %p157
        $region42: #{tpu_custom_call.1} parent=39 // pred_check_branch
          %840 = sbr.rel (%p838) target = $region44
        $region43: #{tpu_custom_call.1} parent=39 // pred_region
          %s842 = ssub.s32 256, 256
          %843 = vsyncadd %s834, %s842
          %s844 = smul.addr %s19, 2
          %s845 = smul.addr %s844, 128
          %s846 = scalar_lea.hbm %s5, %s845
          %s847 = sshll.u32 %s837, 4
          %s848 = int_to_ptr.vmem [resolvable:$true] %s847
          %853 = dma.vmem_to_hbm [thread:$0]  %s848, 256, %s846, %s834, 128, 128, 8
        $region44: #{tpu_custom_call.1} parent=39 // pred_fallthru
          _
      $region40: #{tpu_custom_call.1} parent=5 // pred_fallthru
        _
      %p854 = scmp.le.s32.totalorder 2, %s14
      // Predicated region
      $region45: #{tpu_custom_call.1} parent=5 // pred_check
        %p855 = pneg %p854
      $region46: #{tpu_custom_call.1} parent=5 // pred_check_branch
        %857 = sbr.rel (%p855) target = $region48
      $region47: #{tpu_custom_call.1} parent=5 // pred_region
        %s858 = ssub.s32 %s14, 2
        // Predicated region
        $region49: #{tpu_custom_call.1} parent=47 // pred_check
          %p859 = pneg %p163
        $region50: #{tpu_custom_call.1} parent=47 // pred_check_branch
          %861 = sbr.rel (%p859) target = $region52
        $region51: #{tpu_custom_call.1} parent=47 // pred_region
          %s862 = sand.u32 %s148, 1
          %s863 = scalar_lea.sflag [#allocation3], %s862
          %s864 = sand.u32 %s148, 1
          %s865 = smul.addr %s864, 16
          %s866 = scalar_lea.vmem [#allocation2], %s865
          %867 = dma.done %s863, 256
        $region52: #{tpu_custom_call.1} parent=47 // pred_fallthru
          _
      $region48: #{tpu_custom_call.1} parent=5 // pred_fallthru
        _
    $region6: #{tpu_custom_call.1} parent=1 // loop_footer
      %s18 = sadd.s32 1, %s14
    $region7: #{tpu_custom_call.1} parent=1 // loop_footer_branch
      %13 = sbr.rel target = $region3
    $region8: #{tpu_custom_call.1} parent=1 // loop_exit
      _
    %868 = vsyncpa [#allocation3], 1
    %s869 = scalar_lea.sflag [#allocation3], 1
    %870 = vsyncpa %s869, 1

</llo_original>
